<compile_context>
chip_gen: v7x
topology: tpu7x:2x2x1
jax: 0.10.0
libtpu: 0.0.40
codegen_flags: <defaults>
</compile_context>

<pallas_src>
import jax
import jax.numpy as jnp
from jax.experimental import pallas as pl
from jax.experimental.pallas import tpu as pltpu

FIRST_HIDDEN = 3
STD_Y = 0.1
LANES = 128                    # batch elements per lane row
SUBLANES = 8
CHUNK = SUBLANES * LANES       # 1024 elems = one full (8,128) f32 tile
MAX_BLOCK_ROWS = 2048          # 2048*128*4B = 1 MiB per operand tile


def _mlp_kernel(params_ref, x_ref, noise_ref, o_ref):
    # params_ref (SMEM, f32[10]) = [w1_0..w1_2, b1_0..b1_2, w2_0..w2_2, b2]
    x = x_ref[...]                                   # (block_rows, 128), batch on lanes
    out = params_ref[9] + noise_ref[...] * STD_Y     # b2 + scaled noise
    for j in range(FIRST_HIDDEN):                    # 3 FMAs + relu per element (VPU)
        h = jnp.maximum(x * params_ref[j] + params_ref[FIRST_HIDDEN + j], 0.0)
        out = out + h * params_ref[2 * FIRST_HIDDEN + j]
    o_ref[...] = out


def _pick_block_rows(rows):
    # Prefer >= 2 grid steps (v7x shards the "parallel" axis over 2 TCs), cap the
    # tile at MAX_BLOCK_ROWS: 3 operands x 2 pipeline buffers x 1 MiB = 6 MiB,
    # far under the scoped-VMEM default on every generation.
    half = -(-rows // 2)                                         # ceil(rows / 2)
    half8 = ((half + SUBLANES - 1) // SUBLANES) * SUBLANES       # 8-row aligned
    return max(SUBLANES, min(MAX_BLOCK_ROWS, half8))


def _run_rows(params, x2d, n2d):
    rows = x2d.shape[0]
    block_rows = _pick_block_rows(rows)
    spec = pl.BlockSpec((block_rows, LANES), lambda i: (i, 0))
    return pl.pallas_call(
        _mlp_kernel,
        out_shape=jax.ShapeDtypeStruct((rows, LANES), jnp.float32),
        grid=(pl.cdiv(rows, block_rows),),   # ragged last block handled by Pallas
        in_specs=[
            pl.BlockSpec(memory_space=pltpu.SMEM),  # params: whole (10,) vector
            spec,                                    # x tile
            spec,                                    # noise tile
        ],
        out_specs=spec,
        compiler_params=pltpu.CompilerParams(
            dimension_semantics=("parallel",),
        ),
    )(params, x2d, n2d)


def dnn_forward(x, var, noise):
    """x: (B, 1) f32; var = (W1 (3,1), b1 (3,), W2 (1,3), b2 (1,)); noise: (B,) f32.
    Returns (B, 1) f32 matching the PyTorch DNN.forward."""
    W1, b1, W2, b2 = var
    B = x.shape[0]

    # Pack the 10 parameters into one tiny SMEM vector (~40 bytes).
    params = jnp.concatenate(
        [W1.reshape(-1), b1.reshape(-1), W2.reshape(-1), b2.reshape(-1)]
    ).astype(jnp.float32)

    x_flat = x.reshape(B).astype(jnp.float32)        # (B,1) -> (B,)   free reshape
    n_flat = noise.reshape(B).astype(jnp.float32)

    if B % CHUNK == 0:
        # Zero-copy fast path: reshape to (rows, 128) in, reshape back out.
        rows = B // LANES
        out2d = _run_rows(params,
                          x_flat.reshape(rows, LANES),
                          n_flat.reshape(rows, LANES))
        return out2d.reshape(B, 1)

    # Ragged batch: pad only up to the next full (8,128) tile (<= 1023 zeros),
    # then slice the valid prefix back out.  (One extra input/output copy —
    # choose B % 1024 == 0 upstream for the fully copy-free path.)
    pad = CHUNK - (B % CHUNK)
    rows = (B + pad) // LANES
    x2d = jnp.pad(x_flat, (0, pad)).reshape(rows, LANES)
    n2d = jnp.pad(n_flat, (0, pad)).reshape(rows, LANES)
    out2d = _run_rows(params, x2d, n2d)
    return out2d.reshape(-1)[:B].reshape(B, 1)


if __name__ == "__main__":
    key = jax.random.PRNGKey(0)
    k_x, k_w1, k_b1, k_w2, k_b2, _ = jax.random.split(key, 6)

    # Deterministic synthetic parameters matching nn.Linear(1,3) / nn.Linear(3,1)
    W1 = jax.random.normal(k_w1, (FIRST_HIDDEN, 1), jnp.float32)
    b1 = jax.random.normal(k_b1, (FIRST_HIDDEN,), jnp.float32)
    W2 = jax.random.normal(k_w2, (1, FIRST_HIDDEN), jnp.float32)
    b2 = jax.random.normal(k_b2, (1,), jnp.float32)
    var = (W1, b1, W2, b2)

    def ref_forward(x, noise):
        h = jnp.maximum(x @ W1.T + b1, 0.0)
        return h @ W2.T + b2 + noise[:, None] * STD_Y

    # Exercise: small padded-tail batch, 1024-aligned zero-copy batch, and an
    # unaligned multi-block batch (ragged final grid block).
    for B in (8, 1024, 2560):
        kx, kn = jax.random.split(jax.random.fold_in(k_x, B))
        x = jax.random.normal(kx, (B, 1), jnp.float32)
        # Per-row standard-normal noise (stands in for torch.normal(zeros, ones))
        noise = jax.random.normal(kn, (B,), jnp.float32)

        out = dnn_forward(x, var, noise)
        jax.block_until_ready(out)

        ref = ref_forward(x, noise)
        assert out.shape == (B, 1)
        assert jnp.allclose(out, ref, atol=1e-5), (B, out[:4], ref[:4])

    print("KERNEL_OK")
</pallas_src>

<mosaic_0001>
module attributes {stable_mosaic.version = 11 : i64} {
  func.func @_mlp_kernel(%arg0: i32, %arg1: memref<10xf32, #tpu.memory_space<smem>>, %arg2: memref<8x128xf32, #tpu.memory_space<vmem>>, %arg3: memref<8x128xf32, #tpu.memory_space<vmem>>, %arg4: memref<8x128xf32, #tpu.memory_space<vmem>>) attributes {dimension_semantics = [#tpu.dimension_semantics<parallel>], iteration_bounds = array<i64: 1>, scalar_prefetch = 0 : i64, scratch_operands = 0 : i64, tpu.core_type = #tpu.core_type<tc>, window_params = [{transform_indices = @transform_0, window_bounds = array<i64: 10>}, {transform_indices = @transform_1, window_bounds = array<i64: 8, 128>}, {transform_indices = @transform_2, window_bounds = array<i64: 8, 128>}, {transform_indices = @transform_3, window_bounds = array<i64: 8, 128>}]} {
    %c0 = arith.constant 0 : index
    %c0_0 = arith.constant 0 : index
    %0 = vector.load %arg2[%c0, %c0_0] : memref<8x128xf32, #tpu.memory_space<vmem>>, vector<8x128xf32>
    %c9 = arith.constant 9 : index
    %1 = memref.load %arg1[%c9] : memref<10xf32, #tpu.memory_space<smem>>
    %c0_1 = arith.constant 0 : index
    %c0_2 = arith.constant 0 : index
    %2 = vector.load %arg3[%c0_1, %c0_2] : memref<8x128xf32, #tpu.memory_space<vmem>>, vector<8x128xf32>
    %cst = arith.constant 1.000000e-01 : f32
    %3 = vector.broadcast %cst : f32 to vector<8x128xf32>
    %4 = arith.mulf %2, %3 : vector<8x128xf32>
    %5 = vector.broadcast %1 : f32 to vector<8x128xf32>
    %6 = arith.addf %5, %4 : vector<8x128xf32>
    %c0_3 = arith.constant 0 : index
    %7 = memref.load %arg1[%c0_3] : memref<10xf32, #tpu.memory_space<smem>>
    %8 = vector.broadcast %7 : f32 to vector<8x128xf32>
    %9 = arith.mulf %0, %8 : vector<8x128xf32>
    %c3 = arith.constant 3 : index
    %10 = memref.load %arg1[%c3] : memref<10xf32, #tpu.memory_space<smem>>
    %11 = vector.broadcast %10 : f32 to vector<8x128xf32>
    %12 = arith.addf %9, %11 : vector<8x128xf32>
    %cst_4 = arith.constant 0.000000e+00 : f32
    %13 = vector.broadcast %cst_4 : f32 to vector<8x128xf32>
    %14 = arith.maximumf %12, %13 : vector<8x128xf32>
    %c6 = arith.constant 6 : index
    %15 = memref.load %arg1[%c6] : memref<10xf32, #tpu.memory_space<smem>>
    %16 = vector.broadcast %15 : f32 to vector<8x128xf32>
    %17 = arith.mulf %14, %16 : vector<8x128xf32>
    %18 = arith.addf %6, %17 : vector<8x128xf32>
    %c1 = arith.constant 1 : index
    %19 = memref.load %arg1[%c1] : memref<10xf32, #tpu.memory_space<smem>>
    %20 = vector.broadcast %19 : f32 to vector<8x128xf32>
    %21 = arith.mulf %0, %20 : vector<8x128xf32>
    %c4 = arith.constant 4 : index
    %22 = memref.load %arg1[%c4] : memref<10xf32, #tpu.memory_space<smem>>
    %23 = vector.broadcast %22 : f32 to vector<8x128xf32>
    %24 = arith.addf %21, %23 : vector<8x128xf32>
    %cst_5 = arith.constant 0.000000e+00 : f32
    %25 = vector.broadcast %cst_5 : f32 to vector<8x128xf32>
    %26 = arith.maximumf %24, %25 : vector<8x128xf32>
    %c7 = arith.constant 7 : index
    %27 = memref.load %arg1[%c7] : memref<10xf32, #tpu.memory_space<smem>>
    %28 = vector.broadcast %27 : f32 to vector<8x128xf32>
    %29 = arith.mulf %26, %28 : vector<8x128xf32>
    %30 = arith.addf %18, %29 : vector<8x128xf32>
    %c2 = arith.constant 2 : index
    %31 = memref.load %arg1[%c2] : memref<10xf32, #tpu.memory_space<smem>>
    %32 = vector.broadcast %31 : f32 to vector<8x128xf32>
    %33 = arith.mulf %0, %32 : vector<8x128xf32>
    %c5 = arith.constant 5 : index
    %34 = memref.load %arg1[%c5] : memref<10xf32, #tpu.memory_space<smem>>
    %35 = vector.broadcast %34 : f32 to vector<8x128xf32>
    %36 = arith.addf %33, %35 : vector<8x128xf32>
    %cst_6 = arith.constant 0.000000e+00 : f32
    %37 = vector.broadcast %cst_6 : f32 to vector<8x128xf32>
    %38 = arith.maximumf %36, %37 : vector<8x128xf32>
    %c8 = arith.constant 8 : index
    %39 = memref.load %arg1[%c8] : memref<10xf32, #tpu.memory_space<smem>>
    %40 = vector.broadcast %39 : f32 to vector<8x128xf32>
    %41 = arith.mulf %38, %40 : vector<8x128xf32>
    %42 = arith.addf %30, %41 : vector<8x128xf32>
    %c0_7 = arith.constant 0 : index
    %c0_8 = arith.constant 0 : index
    %43 = vector.load %arg4[%c0_7, %c0_8] : memref<8x128xf32, #tpu.memory_space<vmem>>, vector<8x128xf32>
    tpu.vector_store %arg4[%c0_7, %c0_8], %42 {strides = array<i32>} : memref<8x128xf32, #tpu.memory_space<vmem>>, vector<8x128xf32>,
    return
  }
  func.func @transform_0(%arg0: i32) -> i32 {
    %c0_i32 = arith.constant 0 : i32
    %c0_i32_0 = arith.constant 0 : i32
    return %c0_i32 : i32
  }
  func.func @transform_1(%arg0: i32) -> (i32, i32) {
    %c0_i32 = arith.constant 0 : i32
    %c0_i32_0 = arith.constant 0 : i32
    return %arg0, %c0_i32 : i32, i32
  }
  func.func @transform_2(%arg0: i32) -> (i32, i32) {
    %c0_i32 = arith.constant 0 : i32
    %c0_i32_0 = arith.constant 0 : i32
    return %arg0, %c0_i32 : i32, i32
  }
  func.func @transform_3(%arg0: i32) -> (i32, i32) {
    %c0_i32 = arith.constant 0 : i32
    %c0_i32_0 = arith.constant 0 : i32
    return %arg0, %c0_i32 : i32, i32
  }
}

</mosaic_0001>

<llo_original>
// kernel: tpu_custom_call.1
$region0: #{tpu_custom_call.1}
  #allocation0 [shape = 'u32[]', space=smem, size = 0x4, offset = 0x4, fixed_abs, tag = 'smem constant byte address 0x4 - core index']
  #allocation1 [shape = 'u32[144,128]{1,0:T(1,128)}', space=vmem, size = 0x12000, scoped, tag = 'internal scratch']
  %s0 = inlined_call_operand.hbm [shape: f32[10], index: 0, kind: input, shape index: {}]
  %s1 = inlined_call_operand.hbm [shape: f32[8,128], index: 1, kind: input, shape index: {}]
  %s2 = inlined_call_operand.hbm [shape: f32[8,128], index: 2, kind: input, shape index: {}]
  %s3 = inlined_call_operand.hbm [shape: f32[8,128], index: 3, kind: output, shape index: {}]
  %s4 = sld [smem:[#allocation0]]
  $region34: #{tpu_custom_call.1} parent=0
    _
  %s6 = ssub.s32 1, %s4
  %s7 = scalar_select 0, %s6, %s4
  $region1: #{tpu_custom_call.1} parent=0
    #allocation2 [shape = 'u8[512]{0}', space=smem, size = 0x200, scoped, tag = 'input window, operand 0, single buffered']
    #allocation3 [shape = 's32[1]{0}', space=sflag, size = 0x4, scoped, tag = 'scoped memory for tpu_custom_call.1']
    #allocation4 [shape = 's32[1]{0}', space=sflag, size = 0x4, scoped, tag = 'scoped memory for tpu_custom_call.1']
    #allocation5 [shape = 's32[1]{0}', space=sflag, size = 0x4, scoped, tag = 'scoped memory for tpu_custom_call.1']
    #allocation6 [shape = 'u8[4096]{0}', space=vmem, size = 0x1000, scoped, tag = 'input window, operand 1, single buffered']
    #allocation7 [shape = 'u8[4096]{0}', space=vmem, size = 0x1000, scoped, tag = 'input window, operand 2, single buffered']
    #allocation8 [shape = 's32[1]{0}', space=sflag, size = 0x4, scoped, tag = 'scoped memory for tpu_custom_call.1']
    #allocation9 [shape = 'u8[4096]{0}', space=vmem, size = 0x1000, scoped, tag = 'output window, operand 0, single buffered']
    %8 = vsyncpa [#allocation5], 0
    %9 = vsyncpa [#allocation3], 0
    %10 = vsyncpa [#allocation8], 0
    %11 = vsyncpa [#allocation4], 0
    // Predicated region
    $region2: #{tpu_custom_call.1} parent=1 // pred_check
      _
    $region3: #{tpu_custom_call.1} parent=1 // pred_check_branch
      %13 = sbr.rel (0) target = $region5
    $region4: #{tpu_custom_call.1} parent=1 // pred_region
      %s15 = ssub.s32 16, 16
      %16 = vsyncadd [#allocation5], %s15
      %19 = dma.hbm_to_smem %s0, 16, [#allocation2], [#allocation5]
    $region5: #{tpu_custom_call.1} parent=1 // pred_fallthru
      _
    // Predicated region
    $region6: #{tpu_custom_call.1} parent=1 // pred_check
      _
    $region7: #{tpu_custom_call.1} parent=1 // pred_check_branch
      %21 = sbr.rel (0) target = $region9
    $region8: #{tpu_custom_call.1} parent=1 // pred_region
      %s23 = ssub.s32 128, 128
      %24 = vsyncadd [#allocation3], %s23
      %s26 = sshll.u32 [#allocation6], 4
      %s27 = int_to_ptr.vmem [resolvable:$true] %s26
      %29 = dma.hbm_to_vmem [thread:$0]  %s1, 128, %s27, [#allocation3]
    $region9: #{tpu_custom_call.1} parent=1 // pred_fallthru
      _
    // Predicated region
    $region10: #{tpu_custom_call.1} parent=1 // pred_check
      _
    $region11: #{tpu_custom_call.1} parent=1 // pred_check_branch
      %31 = sbr.rel (0) target = $region13
    $region12: #{tpu_custom_call.1} parent=1 // pred_region
      %s33 = ssub.s32 128, 128
      %34 = vsyncadd [#allocation8], %s33
      %s36 = sshll.u32 [#allocation7], 4
      %s37 = int_to_ptr.vmem [resolvable:$true] %s36
      %39 = dma.hbm_to_vmem [thread:$0]  %s2, 128, %s37, [#allocation8]
    $region13: #{tpu_custom_call.1} parent=1 // pred_fallthru
      _
    // Predicated region
    $region14: #{tpu_custom_call.1} parent=1 // pred_check
      _
    $region15: #{tpu_custom_call.1} parent=1 // pred_check_branch
      %41 = sbr.rel (0) target = $region17
    $region16: #{tpu_custom_call.1} parent=1 // pred_region
      %42 = dma.done [#allocation5], 16
    $region17: #{tpu_custom_call.1} parent=1 // pred_fallthru
      _
    // Predicated region
    $region18: #{tpu_custom_call.1} parent=1 // pred_check
      _
    $region19: #{tpu_custom_call.1} parent=1 // pred_check_branch
      %44 = sbr.rel (0) target = $region21
    $region20: #{tpu_custom_call.1} parent=1 // pred_region
      %45 = dma.done [#allocation3], 128
    $region21: #{tpu_custom_call.1} parent=1 // pred_fallthru
      _
    // Predicated region
    $region22: #{tpu_custom_call.1} parent=1 // pred_check
      _
    $region23: #{tpu_custom_call.1} parent=1 // pred_check_branch
      %47 = sbr.rel (0) target = $region25
    $region24: #{tpu_custom_call.1} parent=1 // pred_region
      %48 = dma.done [#allocation8], 128
    $region25: #{tpu_custom_call.1} parent=1 // pred_fallthru
      _
    %49 = sfence
    %v50 = vld [vmem:[#allocation6] sm:$0xff]
    %s51 = sld [smem:[#allocation2 + $0x9]]
    %v52 = vld [vmem:[#allocation7] sm:$0xff]
    %v53 = vmul.f32 %v52, 0.1
    %v54 = vstv %s51
    %v55 = vadd.f32 %v54, %v53
    %s56 = sld [smem:[#allocation2]]
    %v57 = vstv %s56
    %v58 = vmul.f32 %v50, %v57
    %s59 = sld [smem:[#allocation2 + $0x3]]
    %v60 = vstv %s59
    %v61 = vadd.f32 %v58, %v60
    %v62 = vmax.f32 %v61, 0.0
    %s63 = sld [smem:[#allocation2 + $0x6]]
    %v64 = vstv %s63
    %v65 = vmul.f32 %v62, %v64
    %v66 = vadd.f32 %v55, %v65
    %s67 = sld [smem:[#allocation2 + $0x1]]
    %v68 = vstv %s67
    %v69 = vmul.f32 %v50, %v68
    %s70 = sld [smem:[#allocation2 + $0x4]]
    %v71 = vstv %s70
    %v72 = vadd.f32 %v69, %v71
    %v73 = vmax.f32 %v72, 0.0
    %s74 = sld [smem:[#allocation2 + $0x7]]
    %v75 = vstv %s74
    %v76 = vmul.f32 %v73, %v75
    %v77 = vadd.f32 %v66, %v76
    %s78 = sld [smem:[#allocation2 + $0x2]]
    %v79 = vstv %s78
    %v80 = vmul.f32 %v50, %v79
    %s81 = sld [smem:[#allocation2 + $0x5]]
    %v82 = vstv %s81
    %v83 = vadd.f32 %v80, %v82
    %v84 = vmax.f32 %v83, 0.0
    %s85 = sld [smem:[#allocation2 + $0x8]]
    %v86 = vstv %s85
    %v87 = vmul.f32 %v84, %v86
    %v88 = vadd.f32 %v77, %v87
    %89 = vst [vmem:[#allocation9] sm:$0xff] %v88
    // Predicated region
    $region26: #{tpu_custom_call.1} parent=1 // pred_check
      _
    $region27: #{tpu_custom_call.1} parent=1 // pred_check_branch
      %91 = sbr.rel (0) target = $region29
    $region28: #{tpu_custom_call.1} parent=1 // pred_region
      %s93 = ssub.s32 128, 128
      %94 = vsyncadd [#allocation4], %s93
      %s96 = sshll.u32 [#allocation9], 4
      %s97 = int_to_ptr.vmem [resolvable:$true] %s96
      %99 = dma.vmem_to_hbm [thread:$0]  %s97, 128, %s3, [#allocation4]
    $region29: #{tpu_custom_call.1} parent=1 // pred_fallthru
      _
    // Predicated region
    $region30: #{tpu_custom_call.1} parent=1 // pred_check
      _
    $region31: #{tpu_custom_call.1} parent=1 // pred_check_branch
      %101 = sbr.rel (0) target = $region33
    $region32: #{tpu_custom_call.1} parent=1 // pred_region
      %102 = dma.done [#allocation4], 128
    $region33: #{tpu_custom_call.1} parent=1 // pred_fallthru
      _
    %103 = vsyncpa [#allocation3], 1
    %104 = vsyncpa [#allocation8], 1
    %105 = vsyncpa [#allocation4], 1
    %106 = vsyncpa [#allocation5], 1

</llo_original>
